<compile_context>
chip_gen: v5e
topology: v5e:2x2
jax: 0.10.0
libtpu: 0.0.40
codegen_flags: <defaults>
</compile_context>

<pallas_src>
import jax
import jax.numpy as jnp
from jax import lax
from jax.experimental import pallas as pl
from jax.experimental.pallas import tpu as pltpu


def _round_up(x, m):
    return ((x + m - 1) // m) * m


def _probe_strip_kernel(t_ref, cnorm_ref, out_ref):
    # t_ref:     (S_pad, R_pad)  full projected (padded) sentence; its block
    #                            index is constant over the strip axis, so it
    #                            is only DMA'd when b changes.
    # cnorm_ref: (1, S_pad)      f32 per-token squared norms (precomputed).
    # out_ref:   (tq, S_pad)     one lane-dense output row strip.
    tq, s_pad = out_ref.shape

    row0 = pl.multiple_of(pl.program_id(1) * tq, tq)
    t_rows = t_ref[pl.ds(row0, tq), :]                       # (tq, R_pad)

    # Cross term on the MXU for the whole strip: contract R of both operands
    # (no explicit transpose); f32 accumulation regardless of input dtype.
    gram = lax.dot_general(
        t_rows, t_ref[...],
        dimension_numbers=(((1,), (1,)), ((), ())),
        preferred_element_type=jnp.float32,
    )                                                        # (tq, S_pad) f32

    # Row norms: tq * R_pad VPU work per strip (negligible). Column norms come
    # from the precomputed lane-dense row -> no per-tile reduce / transpose.
    rn = jnp.sum(jnp.square(t_rows.astype(jnp.float32)), axis=-1, keepdims=True)
    d = rn + cnorm_ref[...] - 2.0 * gram
    # Cancellation can produce tiny negatives; true distances are >= 0.
    d = jnp.maximum(d, 0.0)

    # Exact-zero diagonal, matching the explicit-difference formulation.
    rows = row0 + lax.broadcasted_iota(jnp.int32, (tq, s_pad), 0)
    cols = lax.broadcasted_iota(jnp.int32, (tq, s_pad), 1)
    d = jnp.where(rows == cols, 0.0, d)

    out_ref[...] = d.astype(out_ref.dtype)


def structural_probe(batch, proj, *, tile_rows=None,
                     mxu_dtype=jnp.bfloat16, out_dtype=jnp.float32):
    """batch: (B, S, D), proj: (D, R)  ->  (B, S, S) squared L2 distances.

    mxu_dtype: bfloat16 (default) uses the native-bf16 MXU path with f32
      accumulation; pass jnp.float32 for exact module semantics.
    out_dtype: float32 by default (module semantics); bfloat16 halves the
      dominant S^2 HBM write if downstream tolerates it.
    """
    B, S, D = batch.shape
    D2, R = proj.shape
    assert D == D2

    # Lane-align the projected representation only (never the (B,S,D) batch):
    #   S_pad multiple of 128 -> lane-dense unmasked output stores
    #   R_pad multiple of 128 -> well-fed MXU contraction
    S_pad = _round_up(S, 128)
    R_pad = _round_up(R, 128)

    out_esz = jnp.dtype(out_dtype).itemsize
    t_esz = jnp.dtype(mxu_dtype).itemsize
    if tile_rows is None:
        tile_rows = 256 if S_pad % 256 == 0 else 128
        # Keep the double-buffered output strip modest for very long S (v7x).
        while tile_rows > 128 and 2 * tile_rows * S_pad * out_esz > (16 << 20):
            tile_rows //= 2
    tq = tile_rows
    assert S_pad % tq == 0

    # Projection as one XLA MXU matmul (f32 accumulation), stored in the MXU
    # dtype the kernel will contract. Norms are computed from exactly those
    # stored values so the Gram identity stays self-consistent.
    t = jnp.einsum("bsd,dr->bsr",
                   batch.astype(mxu_dtype), proj.astype(mxu_dtype),
                   preferred_element_type=jnp.float32)
    t = t.astype(mxu_dtype)                                   # (B, S, R)
    cnorm = jnp.sum(jnp.square(t.astype(jnp.float32)), axis=-1)  # (B, S)

    if S_pad != S or R_pad != R:
        t = jnp.pad(t, ((0, 0), (0, S_pad - S), (0, R_pad - R)))
    if S_pad != S:
        cnorm = jnp.pad(cnorm, ((0, 0), (0, S_pad - S)))
    cnorm = cnorm[:, None, :]                                 # (B, 1, S_pad)

    # Double-buffered working set + headroom (don't hard-code v7x's 64 MiB).
    vmem_needed = 2 * (S_pad * R_pad * t_esz        # resident t (per b)
                       + 8 * S_pad * 4              # norms row (sublane-padded)
                       + tq * S_pad * out_esz)      # output strip
    vmem_limit = int(min(max(vmem_needed + (8 << 20), 32 << 20), 112 << 20))

    out = pl.pallas_call(
        _probe_strip_kernel,
        out_shape=jax.ShapeDtypeStruct((B, S_pad, S_pad), out_dtype),
        grid=(B, S_pad // tq),
        in_specs=[
            # Whole projected sentence; constant over the strip axis.
            pl.BlockSpec((None, S_pad, R_pad), lambda b, i: (b, 0, 0)),
            pl.BlockSpec((None, 1, S_pad), lambda b, i: (b, 0, 0)),
        ],
        out_specs=pl.BlockSpec((None, tq, S_pad), lambda b, i: (b, i, 0)),
        compiler_params=pltpu.CompilerParams(
            # No cross-step state -> both axes independently schedulable
            # (lets v7x shard across its two TensorCores).
            dimension_semantics=("parallel", "parallel"),
            vmem_limit_bytes=vmem_limit,
        ),
    )(t, cnorm)

    if S_pad == S:
        return out
    # Only needed when S is not already a multiple of 128.
    return out[:, :S, :S]


if __name__ == "__main__":
    # Small shapes consistent with the module: B=2, seq=8, model_dim=32, rank=16
    B, S, D, R = 2, 8, 32, 16

    key = jax.random.PRNGKey(0)
    k_batch, k_proj = jax.random.split(key)

    batch = jax.random.normal(k_batch, (B, S, D), dtype=jnp.float32)
    # nn.init.uniform_(proj, -0.05, 0.05) on a (model_dim, rank) parameter
    proj = jax.random.uniform(k_proj, (D, R), minval=-0.05, maxval=0.05,
                              dtype=jnp.float32)

    # Pure-JAX reference (same math as the PyTorch forward).
    t_ref = jnp.matmul(batch, proj)
    ref = jnp.sum((t_ref[:, :, None, :] - t_ref[:, None, :, :]) ** 2, axis=-1)

    # Exactness mode (f32 MXU path).
    out_f32 = jax.block_until_ready(
        structural_probe(batch, proj, mxu_dtype=jnp.float32))
    assert out_f32.shape == (B, S, S)
    assert jnp.allclose(out_f32, ref, atol=1e-4, rtol=1e-4), \
        float(jnp.max(jnp.abs(out_f32 - ref)))

    # Default fast path (bf16 MXU inputs, f32 accumulation) -> looser tol.
    out_fast = jax.block_until_ready(structural_probe(batch, proj))
    assert out_fast.shape == (B, S, S)
    assert jnp.allclose(out_fast, ref, atol=5e-2, rtol=5e-2), \
        float(jnp.max(jnp.abs(out_fast - ref)))

    print("KERNEL_OK")
</pallas_src>

<mosaic_0001>
module attributes {stable_mosaic.version = 11 : i64} {
  func.func @_probe_strip_kernel(%arg0: i32, %arg1: i32, %arg2: memref<1x128x128xf32, #tpu.memory_space<vmem>>, %arg3: memref<1x1x128xf32, #tpu.memory_space<vmem>>, %arg4: memref<1x128x128xf32, #tpu.memory_space<vmem>>) attributes {dimension_semantics = [#tpu.dimension_semantics<parallel>, #tpu.dimension_semantics<parallel>], iteration_bounds = array<i64: 2, 1>, scalar_prefetch = 0 : i64, scratch_operands = 0 : i64, tpu.core_type = #tpu.core_type<tc>, window_params = [{transform_indices = @transform_0, window_bounds = array<i64: 1, 128, 128>}, {transform_indices = @transform_1, window_bounds = array<i64: 1, 1, 128>}, {transform_indices = @transform_2, window_bounds = array<i64: 1, 128, 128>}]} {
    %c128_i32 = arith.constant 128 : i32
    %0 = arith.muli %arg1, %c128_i32 : i32
    %1 = tpu.assume_multiple %0, 128 : i32
    %c0 = arith.constant 0 : index
    %2 = arith.index_cast %1 : i32 to index
    %c0_0 = arith.constant 0 : index
    %3 = vector.load %arg2[%c0, %2, %c0_0] : memref<1x128x128xf32, #tpu.memory_space<vmem>>, vector<1x128x128xf32>
    %4 = vector.shape_cast %3 : vector<1x128x128xf32> to vector<128x128xf32>
    %c0_1 = arith.constant 0 : index
    %c0_2 = arith.constant 0 : index
    %c0_3 = arith.constant 0 : index
    %5 = vector.load %arg2[%c0_1, %c0_2, %c0_3] : memref<1x128x128xf32, #tpu.memory_space<vmem>>, vector<1x128x128xf32>
    %6 = vector.shape_cast %5 : vector<1x128x128xf32> to vector<128x128xf32>
    %cst = arith.constant dense<0.000000e+00> : vector<128x128xf32>
    %7 = tpu.matmul %4, %6, %cst {dimension_numbers = #tpu.dot_dimension_numbers<[1], [1], [0], [0], [0, 0, 1, 0], [], []>} : vector<128x128xf32>, vector<128x128xf32>, vector<128x128xf32> -> vector<128x128xf32>
    %8 = arith.mulf %4, %4 : vector<128x128xf32>
    %cst_4 = arith.constant dense<0.000000e+00> : vector<128xf32>
    %9 = vector.multi_reduction <add>, %8, %cst_4 [1] : vector<128x128xf32> to vector<128xf32>
    %10 = vector.shape_cast %9 : vector<128xf32> to vector<128x1xf32>
    %c0_5 = arith.constant 0 : index
    %c0_6 = arith.constant 0 : index
    %c0_7 = arith.constant 0 : index
    %11 = vector.load %arg3[%c0_5, %c0_6, %c0_7] : memref<1x1x128xf32, #tpu.memory_space<vmem>>, vector<1x1x128xf32>
    %12 = vector.shape_cast %11 : vector<1x1x128xf32> to vector<1x128xf32>
    %13 = vector.broadcast %10 : vector<128x1xf32> to vector<128x128xf32>
    %14 = vector.broadcast %12 : vector<1x128xf32> to vector<128x128xf32>
    %15 = arith.addf %13, %14 : vector<128x128xf32>
    %cst_8 = arith.constant 2.000000e+00 : f32
    %16 = vector.broadcast %cst_8 : f32 to vector<128x128xf32>
    %17 = arith.mulf %16, %7 : vector<128x128xf32>
    %18 = arith.subf %15, %17 : vector<128x128xf32>
    %cst_9 = arith.constant 0.000000e+00 : f32
    %19 = vector.broadcast %cst_9 : f32 to vector<128x128xf32>
    %20 = arith.maximumf %18, %19 : vector<128x128xf32>
    %21 = tpu.iota {dimensions = array<i32: 0>} : vector<128x128xi32>
    %22 = vector.broadcast %1 : i32 to vector<128x128xi32>
    %23 = arith.addi %22, %21 : vector<128x128xi32>
    %24 = tpu.iota {dimensions = array<i32: 1>} : vector<128x128xi32>
    %25 = arith.cmpi eq, %23, %24 : vector<128x128xi32>
    %cst_10 = arith.constant 0.000000e+00 : f32
    %26 = vector.broadcast %cst_10 : f32 to vector<128x128xf32>
    %27 = arith.select %25, %26, %20 : vector<128x128xi1>, vector<128x128xf32>
    %c0_11 = arith.constant 0 : index
    %c0_12 = arith.constant 0 : index
    %c0_13 = arith.constant 0 : index
    %28 = vector.load %arg4[%c0_11, %c0_12, %c0_13] : memref<1x128x128xf32, #tpu.memory_space<vmem>>, vector<1x128x128xf32>
    %29 = vector.shape_cast %28 : vector<1x128x128xf32> to vector<128x128xf32>
    %30 = vector.shape_cast %27 : vector<128x128xf32> to vector<1x128x128xf32>
    tpu.vector_store %arg4[%c0_11, %c0_12, %c0_13], %30 {strides = array<i32>} : memref<1x128x128xf32, #tpu.memory_space<vmem>>, vector<1x128x128xf32>,
    return
  }
  func.func @transform_0(%arg0: i32, %arg1: i32) -> (i32, i32, i32) {
    %c0_i32 = arith.constant 0 : i32
    %c0_i32_0 = arith.constant 0 : i32
    %c0_i32_1 = arith.constant 0 : i32
    return %arg0, %c0_i32, %c0_i32_0 : i32, i32, i32
  }
  func.func @transform_1(%arg0: i32, %arg1: i32) -> (i32, i32, i32) {
    %c0_i32 = arith.constant 0 : i32
    %c0_i32_0 = arith.constant 0 : i32
    %c0_i32_1 = arith.constant 0 : i32
    return %arg0, %c0_i32, %c0_i32_0 : i32, i32, i32
  }
  func.func @transform_2(%arg0: i32, %arg1: i32) -> (i32, i32, i32) {
    %c0_i32 = arith.constant 0 : i32
    %c0_i32_0 = arith.constant 0 : i32
    return %arg0, %arg1, %c0_i32 : i32, i32, i32
  }
}

</mosaic_0001>

<llo_original>
// kernel: tpu_custom_call.1
$region0: #{tpu_custom_call.1}
  #allocation0 [shape = 'u32[]', space=smem, size = 0x4, offset = 0x4, fixed_abs, tag = 'smem constant byte address 0x4 - core index']
  #allocation1 [shape = 'u32[72,128]{1,0:T(1,128)}', space=vmem, size = 0x9000, scoped, tag = 'internal scratch']
  %s0 = inlined_call_operand.hbm [shape: f32[2,128,128], index: 0, kind: input, shape index: {}]
  %s1 = inlined_call_operand.hbm [shape: f32[2,1,128], index: 1, kind: input, shape index: {}]
  %s2 = inlined_call_operand.hbm [shape: f32[2,128,128], index: 2, kind: output, shape index: {}]
  %s3 = sld [smem:[#allocation0]]
  $region49: #{tpu_custom_call.1} parent=0
    _
  %s5 = ssub.s32 1, %s3
  %s6 = scalar_select 0, %s5, %s3
  $region1: #{tpu_custom_call.1} parent=0
    #allocation2 [shape = 'u8[131072]{0}', space=vmem, size = 0x20000, scoped, tag = 'input window, operand 0']
    #allocation3 [shape = 's32[2]{0}', space=sflag, size = 0x8, scoped, tag = 'scoped memory for tpu_custom_call.1']
    #allocation4 [shape = 's32[2]{0}', space=sflag, size = 0x8, scoped, tag = 'scoped memory for tpu_custom_call.1']
    #allocation5 [shape = 'u8[1024]{0}', space=vmem, size = 0x400, scoped, tag = 'input window, operand 1']
    #allocation6 [shape = 's32[2]{0}', space=sflag, size = 0x8, scoped, tag = 'scoped memory for tpu_custom_call.1']
    #allocation7 [shape = 'u8[131072]{0}', space=vmem, size = 0x20000, scoped, tag = 'output window, operand 0']
    %7 = vsyncpa [#allocation3], 0
    %s8 = scalar_lea.sflag [#allocation3], 1
    %9 = vsyncpa %s8, 0
    %10 = vsyncpa [#allocation6], 0
    %s11 = scalar_lea.sflag [#allocation6], 1
    %12 = vsyncpa %s11, 0
    %13 = vsyncpa [#allocation4], 0
    %s14 = scalar_lea.sflag [#allocation4], 1
    %15 = vsyncpa %s14, 0
    loop: start=0, step=1, limit=4
    $region2: #{tpu_custom_call.1} parent=1 // loop_pre_header
      _
    $region3: #{tpu_custom_call.1} parent=1 // loop_header
      %s17 = sphi 0, %s21
      %p18 = scmp.ge.s32.totalorder %s17, 4
      %s24 = sphi 0, %s36
      %s25 = sphi 0, %s32
      %s26 = sphi 0, %s24
      %s27 = sphi 0, %s25
      %s28 = sphi 0, %s26
      %s29 = sphi 0, %s27
      %s39 = sphi 0, %s41
      %s42 = sphi 0, %s39
      %s43 = sphi 0, %s42
      %s59 = sphi 0, %s43
      %s65 = sphi 0, %s67
      %s68 = sphi 0, %s65
      %s69 = sphi 0, %s68
      %s85 = sphi 0, %s69
      %s93 = sphi 0, %s95
      %s96 = sphi 0, %s93
      %s97 = sphi 0, %s96
      %s113 = sphi 0, %s97
    $region4: #{tpu_custom_call.1} parent=1 // loop_header_branch
      %20 = sbr.rel (%p18) target = $region8
    $region5: #{tpu_custom_call.1} parent=1 // loop_body
      %s22 = ssub.s32 %s17, 1
      %s23 = ssub.s32 %s17, 2
      %s30 = sadd.s32 1, %s25
      %p31 = scmp.ge.s32.totalorder %s30, 1
      %s32 = scalar_select %p31, 0, %s30
      %s33 = sadd.s32 1, %s24
      %s34 = scalar_select %p31, %s33, %s24
      %p35 = scmp.ge.s32.totalorder %s34, 2
      %s36 = scalar_select %p35, 0, %s34
      %s37 = ssub.s32 %s24, %s36
      %p38 = scmp.eq.s32.totalorder %s37, 0
      %s40 = sadd.s32 %s39, 1
      %s41 = scalar_select %p38, %s39, %s40
      %p44 = pneg %p38
      %p45 = scmp.eq.s32.totalorder %s17, 1
      %p46 = por %p44, %p45
      %p47 = scmp.ne.s32.totalorder %s39, %s42
      %p48 = scmp.eq.s32.totalorder %s17, 0
      %p49 = por %p47, %p48
      %p50 = scmp.ne.s32.totalorder %s39, %s42
      %p51 = scmp.eq.s32.totalorder %s22, 1
      %p52 = por %p50, %p51
      %p53 = scmp.ne.s32.totalorder %s42, %s43
      %p54 = scmp.eq.s32.totalorder %s22, 0
      %p55 = por %p53, %p54
      %p56 = scmp.ne.s32.totalorder %s42, %s43
      %p57 = scmp.eq.s32.totalorder %s23, 1
      %p58 = por %p56, %p57
      %p60 = scmp.ne.s32.totalorder %s43, %s59
      %p61 = scmp.eq.s32.totalorder %s23, 0
      %p62 = por %p60, %p61
      %s63 = ssub.s32 %s24, %s36
      %p64 = scmp.eq.s32.totalorder %s63, 0
      %s66 = sadd.s32 %s65, 1
      %s67 = scalar_select %p64, %s65, %s66
      %p70 = pneg %p64
      %p71 = scmp.eq.s32.totalorder %s17, 1
      %p72 = por %p70, %p71
      %p73 = scmp.ne.s32.totalorder %s65, %s68
      %p74 = scmp.eq.s32.totalorder %s17, 0
      %p75 = por %p73, %p74
      %p76 = scmp.ne.s32.totalorder %s65, %s68
      %p77 = scmp.eq.s32.totalorder %s22, 1
      %p78 = por %p76, %p77
      %p79 = scmp.ne.s32.totalorder %s68, %s69
      %p80 = scmp.eq.s32.totalorder %s22, 0
      %p81 = por %p79, %p80
      %p82 = scmp.ne.s32.totalorder %s68, %s69
      %p83 = scmp.eq.s32.totalorder %s23, 1
      %p84 = por %p82, %p83
      %p86 = scmp.ne.s32.totalorder %s69, %s85
      %p87 = scmp.eq.s32.totalorder %s23, 0
      %p88 = por %p86, %p87
      %s89 = ssub.s32 %s24, %s36
      %s90 = ssub.s32 %s25, %s32
      %s91 = sor.u32 %s89, %s90
      %p92 = scmp.eq.s32.totalorder %s91, 0
      %s94 = sadd.s32 %s93, 1
      %s95 = scalar_select %p92, %s93, %s94
      %p98 = pneg %p92
      %p99 = scmp.eq.s32.totalorder %s17, 1
      %p100 = por %p98, %p99
      %p101 = scmp.ne.s32.totalorder %s93, %s96
      %p102 = scmp.eq.s32.totalorder %s17, 0
      %p103 = por %p101, %p102
      %p104 = scmp.ne.s32.totalorder %s93, %s96
      %p105 = scmp.eq.s32.totalorder %s22, 1
      %p106 = por %p104, %p105
      %p107 = scmp.ne.s32.totalorder %s96, %s97
      %p108 = scmp.eq.s32.totalorder %s22, 0
      %p109 = por %p107, %p108
      %p110 = scmp.ne.s32.totalorder %s96, %s97
      %p111 = scmp.eq.s32.totalorder %s23, 1
      %p112 = por %p110, %p111
      %p114 = scmp.ne.s32.totalorder %s97, %s113
      %p115 = scmp.eq.s32.totalorder %s23, 0
      %p116 = por %p114, %p115
      %p117 = scmp.le.s32.totalorder 1, %s17
      %p118 = scmp.lt.s32.totalorder %s17, 3
      %p119 = pnand %p117, %p118
      %p120 = pneg %p119
      // Predicated region
      $region9: #{tpu_custom_call.1} parent=5 // pred_check
        _
      $region10: #{tpu_custom_call.1} parent=5 // pred_check_branch
        %122 = sbr.rel (%p119) target = $region12
      $region11: #{tpu_custom_call.1} parent=5 // pred_region
        %s123 = ssub.s32 %s17, 1
      $region12: #{tpu_custom_call.1} parent=5 // pred_fallthru
        _
      %p124 = scmp.lt.s32.totalorder %s17, 2
      // Predicated region
      $region13: #{tpu_custom_call.1} parent=5 // pred_check
        %p125 = pneg %p124
      $region14: #{tpu_custom_call.1} parent=5 // pred_check_branch
        %127 = sbr.rel (%p125) target = $region16
      $region15: #{tpu_custom_call.1} parent=5 // pred_region
        // Predicated region
        $region17: #{tpu_custom_call.1} parent=15 // pred_check
          %p128 = pneg %p49
        $region18: #{tpu_custom_call.1} parent=15 // pred_check_branch
          %130 = sbr.rel (%p128) target = $region20
        $region19: #{tpu_custom_call.1} parent=15 // pred_region
          %s131 = sand.u32 %s39, 1
          %s132 = scalar_lea.sflag [#allocation3], %s131
          %s133 = sand.u32 %s39, 1
          %s134 = smul.addr %s133, 128
          %s135 = scalar_lea.vmem [#allocation2], %s134
          %137 = vsyncadd %s132, 0
          %s138 = smul.addr %s24, 16
          %s139 = smul.addr %s138, 8
          %s140 = scalar_lea.hbm %s0, %s139
          %s141 = sshll.u32 %s140, 4
          %s142 = int_to_ptr.hbm [resolvable:$true] %s141
          %s143 = sshll.u32 %s135, 4
          %s144 = int_to_ptr.vmem [resolvable:$true] %s143
          %149 = dma.hbm_to_vmem [thread:$0]  %s142, 2048, %s144, %s132, 128, 128, 8
        $region20: #{tpu_custom_call.1} parent=15 // pred_fallthru
          _
        // Predicated region
        $region21: #{tpu_custom_call.1} parent=15 // pred_check
          %p150 = pneg %p75
        $region22: #{tpu_custom_call.1} parent=15 // pred_check_branch
          %152 = sbr.rel (%p150) target = $region24
        $region23: #{tpu_custom_call.1} parent=15 // pred_region
          %s153 = sand.u32 %s65, 1
          %s154 = scalar_lea.sflag [#allocation6], %s153
          %s155 = sand.u32 %s65, 1
          %s156 = scalar_lea.vmem [#allocation5], %s155
          %158 = vsyncadd %s154, 0
          %s159 = scalar_lea.hbm %s1, %s24
          %s161 = sshll.u32 %s159, 4
          %s162 = int_to_ptr.hbm [resolvable:$true] %s161
          %s163 = sshll.u32 %s156, 4
          %s164 = int_to_ptr.vmem [resolvable:$true] %s163
          %166 = dma.hbm_to_vmem [thread:$0]  %s162, 16, %s164, %s154
        $region24: #{tpu_custom_call.1} parent=15 // pred_fallthru
          _
      $region16: #{tpu_custom_call.1} parent=5 // pred_fallthru
        _
      %p167 = scmp.le.s32.totalorder 1, %s17
      %p168 = scmp.lt.s32.totalorder %s17, 3
      %p169 = pnand %p167, %p168
      %p170 = pneg %p169
      // Predicated region
      $region25: #{tpu_custom_call.1} parent=5 // pred_check
        _
      $region26: #{tpu_custom_call.1} parent=5 // pred_check_branch
        %172 = sbr.rel (%p169) target = $region28
      $region27: #{tpu_custom_call.1} parent=5 // pred_region
        %s173 = ssub.s32 %s17, 1
        %s174 = sand.u32 %s42, 1
        %s175 = scalar_lea.sflag [#allocation3], %s174
        %s176 = sand.u32 %s42, 1
        %s177 = smul.addr %s176, 128
        %s178 = scalar_lea.vmem [#allocation2], %s177
        // Predicated region
        $region29: #{tpu_custom_call.1} parent=27 // pred_check
          %p179 = pneg %p55
        $region30: #{tpu_custom_call.1} parent=27 // pred_check_branch
          %181 = sbr.rel (%p179) target = $region32
        $region31: #{tpu_custom_call.1} parent=27 // pred_region
          %183 = dma.done %s175, 2048
        $region32: #{tpu_custom_call.1} parent=27 // pred_fallthru
          _
        %s184 = sand.u32 %s68, 1
        %s185 = scalar_lea.sflag [#allocation6], %s184
        %s186 = sand.u32 %s68, 1
        %s187 = scalar_lea.vmem [#allocation5], %s186
        // Predicated region
        $region33: #{tpu_custom_call.1} parent=27 // pred_check
          %p188 = pneg %p81
        $region34: #{tpu_custom_call.1} parent=27 // pred_check_branch
          %190 = sbr.rel (%p188) target = $region36
        $region35: #{tpu_custom_call.1} parent=27 // pred_region
          %192 = dma.done %s185, 16
        $region36: #{tpu_custom_call.1} parent=27 // pred_fallthru
          _
        %s193 = sand.u32 %s42, 1
        %s194 = scalar_lea.sflag [#allocation3], %s193
        %s195 = sand.u32 %s42, 1
        %s196 = smul.addr %s195, 128
        %s197 = scalar_lea.vmem [#allocation2], %s196
        %p198 = pneg %p55
        %p199 = pneg %p52
        %s200 = sand.u32 %s68, 1
        %s201 = scalar_lea.sflag [#allocation6], %s200
        %s202 = sand.u32 %s68, 1
        %s203 = scalar_lea.vmem [#allocation5], %s202
        %p204 = pneg %p81
        %p205 = pneg %p78
        %p206 = pneg %p109
        %p207 = pneg %p106
        %s208 = sand.u32 %s96, 1
        %s209 = scalar_lea.sflag [#allocation4], %s208
        %s210 = sand.u32 %s96, 1
        %s211 = smul.addr %s210, 128
        %s212 = scalar_lea.vmem [#allocation7], %s211
        %s213 = smul.u32 16, %s27
        %s214 = smul.u32 %s27, 128
        %s215 = scalar_lea.vmem %s178, %s214 [#allocation2]
        %v216 = vld [vmem:[%s215] sm:$0xff]
        %v217 = vld [vmem:[%s215 + $0x8] sm:$0xff]
        %v218 = vld [vmem:[%s215 + $0x10] sm:$0xff]
        %v219 = vld [vmem:[%s215 + $0x18] sm:$0xff]
        %v220 = vld [vmem:[%s215 + $0x20] sm:$0xff]
        %v221 = vld [vmem:[%s215 + $0x28] sm:$0xff]
        %v222 = vld [vmem:[%s215 + $0x30] sm:$0xff]
        %v223 = vld [vmem:[%s215 + $0x38] sm:$0xff]
        %v224 = vld [vmem:[%s215 + $0x40] sm:$0xff]
        %v225 = vld [vmem:[%s215 + $0x48] sm:$0xff]
        %v226 = vld [vmem:[%s215 + $0x50] sm:$0xff]
        %v227 = vld [vmem:[%s215 + $0x58] sm:$0xff]
        %v228 = vld [vmem:[%s215 + $0x60] sm:$0xff]
        %v229 = vld [vmem:[%s215 + $0x68] sm:$0xff]
        %v230 = vld [vmem:[%s215 + $0x70] sm:$0xff]
        %v231 = vld [vmem:[%s215 + $0x78] sm:$0xff]
        %v232 = vld [vmem:[%s178] sm:$0xff]
        %v233 = vld [vmem:[%s178 + $0x8] sm:$0xff]
        %v234 = vld [vmem:[%s178 + $0x10] sm:$0xff]
        %v235 = vld [vmem:[%s178 + $0x18] sm:$0xff]
        %v236 = vld [vmem:[%s178 + $0x20] sm:$0xff]
        %v237 = vld [vmem:[%s178 + $0x28] sm:$0xff]
        %v238 = vld [vmem:[%s178 + $0x30] sm:$0xff]
        %v239 = vld [vmem:[%s178 + $0x38] sm:$0xff]
        %v240 = vld [vmem:[%s178 + $0x40] sm:$0xff]
        %v241 = vld [vmem:[%s178 + $0x48] sm:$0xff]
        %v242 = vld [vmem:[%s178 + $0x50] sm:$0xff]
        %v243 = vld [vmem:[%s178 + $0x58] sm:$0xff]
        %v244 = vld [vmem:[%s178 + $0x60] sm:$0xff]
        %v245 = vld [vmem:[%s178 + $0x68] sm:$0xff]
        %v246 = vld [vmem:[%s178 + $0x70] sm:$0xff]
        %v247 = vld [vmem:[%s178 + $0x78] sm:$0xff]
        %248 = vmatpush.xpose.msra.mxu0 %v247
        %249 = vmatpush.xpose.msra.mxu0 %v246
        %250 = vmatpush.xpose.msra.mxu0 %v245
        %251 = vmatpush.xpose.msra.mxu0 %v244
        %252 = vmatpush.xpose.msra.mxu0 %v243
        %253 = vmatpush.xpose.msra.mxu0 %v242
        %254 = vmatpush.xpose.msra.mxu0 %v241
        %255 = vmatpush.xpose.msra.mxu0 %v240
        %256 = vmatpush.xpose.msra.mxu0 %v239
        %257 = vmatpush.xpose.msra.mxu0 %v238
        %258 = vmatpush.xpose.msra.mxu0 %v237
        %259 = vmatpush.xpose.msra.mxu0 %v236
        %260 = vmatpush.xpose.msra.mxu0 %v235
        %261 = vmatpush.xpose.msra.mxu0 %v234
        %262 = vmatpush.xpose.msra.mxu0 %v233
        %263 = vmatpush.xpose.msra.mxu0 %v232
        %264 = vmatmul.f32.gmra.mxu0 %v216
        %v265 = vpop.f32.mrf.mxu0
        %v266 = vadd.f32 0.0, %v265
        %267 = vmatmul.f32.gmra.mxu0 %v217
        %v268 = vpop.f32.mrf.mxu0
        %v269 = vadd.f32 0.0, %v268
        %270 = vmatmul.f32.gmra.mxu0 %v218
        %v271 = vpop.f32.mrf.mxu0
        %v272 = vadd.f32 0.0, %v271
        %273 = vmatmul.f32.gmra.mxu0 %v219
        %v274 = vpop.f32.mrf.mxu0
        %v275 = vadd.f32 0.0, %v274
        %276 = vmatmul.f32.gmra.mxu0 %v220
        %v277 = vpop.f32.mrf.mxu0
        %v278 = vadd.f32 0.0, %v277
        %279 = vmatmul.f32.gmra.mxu0 %v221
        %v280 = vpop.f32.mrf.mxu0
        %v281 = vadd.f32 0.0, %v280
        %282 = vmatmul.f32.gmra.mxu0 %v222
        %v283 = vpop.f32.mrf.mxu0
        %v284 = vadd.f32 0.0, %v283
        %285 = vmatmul.f32.gmra.mxu0 %v223
        %v286 = vpop.f32.mrf.mxu0
        %v287 = vadd.f32 0.0, %v286
        %288 = vmatmul.f32.gmra.mxu0 %v224
        %v289 = vpop.f32.mrf.mxu0
        %v290 = vadd.f32 0.0, %v289
        %291 = vmatmul.f32.gmra.mxu0 %v225
        %v292 = vpop.f32.mrf.mxu0
        %v293 = vadd.f32 0.0, %v292
        %294 = vmatmul.f32.gmra.mxu0 %v226
        %v295 = vpop.f32.mrf.mxu0
        %v296 = vadd.f32 0.0, %v295
        %297 = vmatmul.f32.gmra.mxu0 %v227
        %v298 = vpop.f32.mrf.mxu0
        %v299 = vadd.f32 0.0, %v298
        %300 = vmatmul.f32.gmra.mxu0 %v228
        %v301 = vpop.f32.mrf.mxu0
        %v302 = vadd.f32 0.0, %v301
        %303 = vmatmul.f32.gmra.mxu0 %v229
        %v304 = vpop.f32.mrf.mxu0
        %v305 = vadd.f32 0.0, %v304
        %306 = vmatmul.f32.gmra.mxu0 %v230
        %v307 = vpop.f32.mrf.mxu0
        %v308 = vadd.f32 0.0, %v307
        %309 = vmatmul.f32.gmra.mxu0 %v231
        %v310 = vpop.f32.mrf.mxu0
        %v311 = vadd.f32 0.0, %v310
        %312 = vdwg.mxu0
        %v313 = vmul.f32 %v216, %v216
        %v314 = vmul.f32 %v217, %v217
        %v315 = vmul.f32 %v218, %v218
        %v316 = vmul.f32 %v219, %v219
        %v317 = vmul.f32 %v220, %v220
        %v318 = vmul.f32 %v221, %v221
        %v319 = vmul.f32 %v222, %v222
        %v320 = vmul.f32 %v223, %v223
        %v321 = vmul.f32 %v224, %v224
        %v322 = vmul.f32 %v225, %v225
        %v323 = vmul.f32 %v226, %v226
        %v324 = vmul.f32 %v227, %v227
        %v325 = vmul.f32 %v228, %v228
        %v326 = vmul.f32 %v229, %v229
        %v327 = vmul.f32 %v230, %v230
        %v328 = vmul.f32 %v231, %v231
        %329 = vadd.xlane.f32.xlu0 %v313
        %v330 = vpop.xlane.xlu0 %329
        %331 = vadd.xlane.f32.xlu0 %v314
        %v332 = vpop.xlane.xlu0 %331
        %333 = vadd.xlane.f32.xlu0 %v315
        %v334 = vpop.xlane.xlu0 %333
        %335 = vadd.xlane.f32.xlu0 %v316
        %v336 = vpop.xlane.xlu0 %335
        %337 = vadd.xlane.f32.xlu0 %v317
        %v338 = vpop.xlane.xlu0 %337
        %339 = vadd.xlane.f32.xlu0 %v318
        %v340 = vpop.xlane.xlu0 %339
        %341 = vadd.xlane.f32.xlu0 %v319
        %v342 = vpop.xlane.xlu0 %341
        %343 = vadd.xlane.f32.xlu0 %v320
        %v344 = vpop.xlane.xlu0 %343
        %345 = vadd.xlane.f32.xlu0 %v321
        %v346 = vpop.xlane.xlu0 %345
        %347 = vadd.xlane.f32.xlu0 %v322
        %v348 = vpop.xlane.xlu0 %347
        %349 = vadd.xlane.f32.xlu0 %v323
        %v350 = vpop.xlane.xlu0 %349
        %351 = vadd.xlane.f32.xlu0 %v324
        %v352 = vpop.xlane.xlu0 %351
        %353 = vadd.xlane.f32.xlu0 %v325
        %v354 = vpop.xlane.xlu0 %353
        %355 = vadd.xlane.f32.xlu0 %v326
        %v356 = vpop.xlane.xlu0 %355
        %357 = vadd.xlane.f32.xlu0 %v327
        %v358 = vpop.xlane.xlu0 %357
        %359 = vadd.xlane.f32.xlu0 %v328
        %v360 = vpop.xlane.xlu0 %359
        %v361 = vld [vmem:[%s187] sm:$0x1]
        %v363 = vperm.slane %v361, 0
        %v365 = vadd.f32 %v330, %v363
        %v366 = vadd.f32 %v332, %v363
        %v367 = vadd.f32 %v334, %v363
        %v368 = vadd.f32 %v336, %v363
        %v369 = vadd.f32 %v338, %v363
        %v370 = vadd.f32 %v340, %v363
        %v371 = vadd.f32 %v342, %v363
        %v372 = vadd.f32 %v344, %v363
        %v373 = vadd.f32 %v346, %v363
        %v374 = vadd.f32 %v348, %v363
        %v375 = vadd.f32 %v350, %v363
        %v376 = vadd.f32 %v352, %v363
        %v377 = vadd.f32 %v354, %v363
        %v378 = vadd.f32 %v356, %v363
        %v379 = vadd.f32 %v358, %v363
        %v380 = vadd.f32 %v360, %v363
        %v381 = vmul.f32 %v266, 2.0
        %v382 = vmul.f32 %v269, 2.0
        %v383 = vmul.f32 %v272, 2.0
        %v384 = vmul.f32 %v275, 2.0
        %v385 = vmul.f32 %v278, 2.0
        %v386 = vmul.f32 %v281, 2.0
        %v387 = vmul.f32 %v284, 2.0
        %v388 = vmul.f32 %v287, 2.0
        %v389 = vmul.f32 %v290, 2.0
        %v390 = vmul.f32 %v293, 2.0
        %v391 = vmul.f32 %v296, 2.0
        %v392 = vmul.f32 %v299, 2.0
        %v393 = vmul.f32 %v302, 2.0
        %v394 = vmul.f32 %v305, 2.0
        %v395 = vmul.f32 %v308, 2.0
        %v396 = vmul.f32 %v311, 2.0
        %v397 = vsub.f32 %v365, %v381
        %v398 = vsub.f32 %v366, %v382
        %v399 = vsub.f32 %v367, %v383
        %v400 = vsub.f32 %v368, %v384
        %v401 = vsub.f32 %v369, %v385
        %v402 = vsub.f32 %v370, %v386
        %v403 = vsub.f32 %v371, %v387
        %v404 = vsub.f32 %v372, %v388
        %v405 = vsub.f32 %v373, %v389
        %v406 = vsub.f32 %v374, %v390
        %v407 = vsub.f32 %v375, %v391
        %v408 = vsub.f32 %v376, %v392
        %v409 = vsub.f32 %v377, %v393
        %v410 = vsub.f32 %v378, %v394
        %v411 = vsub.f32 %v379, %v395
        %v412 = vsub.f32 %v380, %v396
        %v413 = vmax.f32 %v397, 0.0
        %v414 = vmax.f32 %v398, 0.0
        %v415 = vmax.f32 %v399, 0.0
        %v416 = vmax.f32 %v400, 0.0
        %v417 = vmax.f32 %v401, 0.0
        %v418 = vmax.f32 %v402, 0.0
        %v419 = vmax.f32 %v403, 0.0
        %v420 = vmax.f32 %v404, 0.0
        %v421 = vmax.f32 %v405, 0.0
        %v422 = vmax.f32 %v406, 0.0
        %v423 = vmax.f32 %v407, 0.0
        %v424 = vmax.f32 %v408, 0.0
        %v425 = vmax.f32 %v409, 0.0
        %v426 = vmax.f32 %v410, 0.0
        %v427 = vmax.f32 %v411, 0.0
        %v428 = vmax.f32 %v412, 0.0
        %v429 = vlaneseq
        %v430 = vshrl.u32 %v429, 7
        %v431 = vadd.s32 %v430, 8
        %v432 = vadd.s32 %v430, 16
        %v433 = vadd.s32 %v430, 24
        %v434 = vadd.s32 %v430, 32
        %v435 = vadd.s32 %v430, 40
        %v436 = vadd.s32 %v430, 48
        %v437 = vadd.s32 %v430, 56
        %v438 = vadd.s32 %v430, 64
        %v439 = vadd.s32 %v430, 72
        %v440 = vadd.s32 %v430, 80
        %v441 = vadd.s32 %v430, 88
        %v442 = vadd.s32 %v430, 96
        %v443 = vadd.s32 %v430, 104
        %v444 = vadd.s32 %v430, 112
        %v445 = vadd.s32 %v430, 120
        %v446 = vstv %s214
        %v447 = vadd.s32 %v446, %v430
        %v448 = vadd.s32 %v446, %v431
        %v449 = vadd.s32 %v446, %v432
        %v450 = vadd.s32 %v446, %v433
        %v451 = vadd.s32 %v446, %v434
        %v452 = vadd.s32 %v446, %v435
        %v453 = vadd.s32 %v446, %v436
        %v454 = vadd.s32 %v446, %v437
        %v455 = vadd.s32 %v446, %v438
        %v456 = vadd.s32 %v446, %v439
        %v457 = vadd.s32 %v446, %v440
        %v458 = vadd.s32 %v446, %v441
        %v459 = vadd.s32 %v446, %v442
        %v460 = vadd.s32 %v446, %v443
        %v461 = vadd.s32 %v446, %v444
        %v462 = vadd.s32 %v446, %v445
        %v463 = vlaneseq
        %v464 = vand.u32 %v463, 127
        %vm465 = vcmp.eq.s32.totalorder %v447, %v464
        %vm466 = vcmp.eq.s32.totalorder %v448, %v464
        %vm467 = vcmp.eq.s32.totalorder %v449, %v464
        %vm468 = vcmp.eq.s32.totalorder %v450, %v464
        %vm469 = vcmp.eq.s32.totalorder %v451, %v464
        %vm470 = vcmp.eq.s32.totalorder %v452, %v464
        %vm471 = vcmp.eq.s32.totalorder %v453, %v464
        %vm472 = vcmp.eq.s32.totalorder %v454, %v464
        %vm473 = vcmp.eq.s32.totalorder %v455, %v464
        %vm474 = vcmp.eq.s32.totalorder %v456, %v464
        %vm475 = vcmp.eq.s32.totalorder %v457, %v464
        %vm476 = vcmp.eq.s32.totalorder %v458, %v464
        %vm477 = vcmp.eq.s32.totalorder %v459, %v464
        %vm478 = vcmp.eq.s32.totalorder %v460, %v464
        %vm479 = vcmp.eq.s32.totalorder %v461, %v464
        %vm480 = vcmp.eq.s32.totalorder %v462, %v464
        %v481 = vsel %vm465, 0.0, %v413
        %v482 = vsel %vm466, 0.0, %v414
        %v483 = vsel %vm467, 0.0, %v415
        %v484 = vsel %vm468, 0.0, %v416
        %v485 = vsel %vm469, 0.0, %v417
        %v486 = vsel %vm470, 0.0, %v418
        %v487 = vsel %vm471, 0.0, %v419
        %v488 = vsel %vm472, 0.0, %v420
        %v489 = vsel %vm473, 0.0, %v421
        %v490 = vsel %vm474, 0.0, %v422
        %v491 = vsel %vm475, 0.0, %v423
        %v492 = vsel %vm476, 0.0, %v424
        %v493 = vsel %vm477, 0.0, %v425
        %v494 = vsel %vm478, 0.0, %v426
        %v495 = vsel %vm479, 0.0, %v427
        %v496 = vsel %vm480, 0.0, %v428
        %497 = vst [vmem:[%s212] sm:$0xff] %v481
        %498 = vst [vmem:[%s212 + $0x8] sm:$0xff] %v482
        %499 = vst [vmem:[%s212 + $0x10] sm:$0xff] %v483
        %500 = vst [vmem:[%s212 + $0x18] sm:$0xff] %v484
        %501 = vst [vmem:[%s212 + $0x20] sm:$0xff] %v485
        %502 = vst [vmem:[%s212 + $0x28] sm:$0xff] %v486
        %503 = vst [vmem:[%s212 + $0x30] sm:$0xff] %v487
        %504 = vst [vmem:[%s212 + $0x38] sm:$0xff] %v488
        %505 = vst [vmem:[%s212 + $0x40] sm:$0xff] %v489
        %506 = vst [vmem:[%s212 + $0x48] sm:$0xff] %v490
        %507 = vst [vmem:[%s212 + $0x50] sm:$0xff] %v491
        %508 = vst [vmem:[%s212 + $0x58] sm:$0xff] %v492
        %509 = vst [vmem:[%s212 + $0x60] sm:$0xff] %v493
        %510 = vst [vmem:[%s212 + $0x68] sm:$0xff] %v494
        %511 = vst [vmem:[%s212 + $0x70] sm:$0xff] %v495
        %512 = vst [vmem:[%s212 + $0x78] sm:$0xff] %v496
        %s513 = sand.u32 %s96, 1
        %s514 = scalar_lea.sflag [#allocation4], %s513
        %s515 = sand.u32 %s96, 1
        %s516 = smul.addr %s515, 128
        %s517 = scalar_lea.vmem [#allocation7], %s516
        // Predicated region
        $region37: #{tpu_custom_call.1} parent=27 // pred_check
          %p518 = pneg %p106
        $region38: #{tpu_custom_call.1} parent=27 // pred_check_branch
          %520 = sbr.rel (%p518) target = $region40
        $region39: #{tpu_custom_call.1} parent=27 // pred_region
          %s521 = smul.u32 16, %s27
          %523 = vsyncadd %s514, 0
          %s524 = smul.addr %s26, 16
          %s525 = sadd.s32 %s521, %s524
          %s526 = smul.addr %s525, 8
          %s527 = scalar_lea.hbm %s2, %s526
          %s528 = sshll.u32 %s517, 4
          %s529 = int_to_ptr.vmem [resolvable:$true] %s528
          %s530 = sshll.u32 %s527, 4
          %s531 = int_to_ptr.hbm [resolvable:$true] %s530
          %536 = dma.vmem_to_hbm [thread:$0]  %s529, 2048, %s531, %s514, 128, 128, 8
        $region40: #{tpu_custom_call.1} parent=27 // pred_fallthru
          _
      $region28: #{tpu_custom_call.1} parent=5 // pred_fallthru
        _
      %p537 = scmp.le.s32.totalorder 2, %s17
      // Predicated region
      $region41: #{tpu_custom_call.1} parent=5 // pred_check
        %p538 = pneg %p537
      $region42: #{tpu_custom_call.1} parent=5 // pred_check_branch
        %540 = sbr.rel (%p538) target = $region44
      $region43: #{tpu_custom_call.1} parent=5 // pred_region
        %s541 = ssub.s32 %s17, 2
        // Predicated region
        $region45: #{tpu_custom_call.1} parent=43 // pred_check
          %p542 = pneg %p112
        $region46: #{tpu_custom_call.1} parent=43 // pred_check_branch
          %544 = sbr.rel (%p542) target = $region48
        $region47: #{tpu_custom_call.1} parent=43 // pred_region
          %s545 = sand.u32 %s97, 1
          %s546 = scalar_lea.sflag [#allocation4], %s545
          %s547 = sand.u32 %s97, 1
          %s548 = smul.addr %s547, 128
          %s549 = scalar_lea.vmem [#allocation7], %s548
          %551 = dma.done %s546, 2048
        $region48: #{tpu_custom_call.1} parent=43 // pred_fallthru
          _
      $region44: #{tpu_custom_call.1} parent=5 // pred_fallthru
        _
    $region6: #{tpu_custom_call.1} parent=1 // loop_footer
      %s21 = sadd.s32 1, %s17
    $region7: #{tpu_custom_call.1} parent=1 // loop_footer_branch
      %16 = sbr.rel target = $region3
    $region8: #{tpu_custom_call.1} parent=1 // loop_exit
      _
    %552 = vsyncpa [#allocation3], 1
    %s553 = scalar_lea.sflag [#allocation3], 1
    %554 = vsyncpa %s553, 1
    %555 = vsyncpa [#allocation6], 1
    %s556 = scalar_lea.sflag [#allocation6], 1
    %557 = vsyncpa %s556, 1
    %558 = vsyncpa [#allocation4], 1
    %s559 = scalar_lea.sflag [#allocation4], 1
    %560 = vsyncpa %s559, 1

</llo_original>
